<compile_context>
chip_gen: v5e
topology: v5e:2x2
jax: 0.10.0
libtpu: 0.0.40
codegen_flags: <defaults>
</compile_context>

<pallas_src>
import jax
import jax.numpy as jnp
from jax.experimental import pallas as pl
from jax.experimental.pallas import tpu as pltpu


def _wtlu_kernel(lw_ref, zc_ref, w1_ref, b1_ref, w23_ref, b23_ref, out_ref):
    B, orig_dim, map_dim = out_ref.shape

    # z_cov = (z_cov - z_cov.mean()) / z_cov.std()   (torch.std default: unbiased, n-1)
    # Normalized ONCE; shared by both instances.
    z = zc_ref[...]
    n = z.shape[0] * z.shape[1]
    mean = jnp.sum(z) * (1.0 / n)
    diff = z - mean
    zn = diff * jax.lax.rsqrt(jnp.sum(diff * diff) * (1.0 / (n - 1)))

    # hidden = relu(linear_1(zn).t()) for BOTH instances in one MXU pass.
    # w1_ref is the stacked (B*orig_dim, map_dim) torch-layout weight; both the
    # nn.Linear transpose and the .t() are folded into the contraction.
    hidden = jax.lax.dot_general(
        w1_ref[...], zn,
        dimension_numbers=(((1,), (1,)), ((), ())),
        preferred_element_type=jnp.float32)
    hidden = jnp.maximum(hidden + b1_ref[...], 0.0)        # (B*orig_dim, map_dim)

    # Per-instance fused [linear_2 | linear_3]; B is tiny and static, so a
    # Python unroll avoids any batched reshape / relayout.
    for b in range(B):
        hb = hidden[b * orig_dim:(b + 1) * orig_dim, :]     # (orig_dim, map_dim)
        fused = jnp.dot(hb, w23_ref[b],
                        preferred_element_type=jnp.float32) + b23_ref[b]
        w_update = jnp.clip(fused[:, :map_dim], -0.1, 0.1)
        gate = 1.0 / (1.0 + jnp.exp(-fused[:, map_dim:]))   # exact sigmoid

        # (1 - gate) * last_w + gate * w_update  ==  last_w + gate * (w_update - last_w)
        lw = lw_ref[b]
        out_ref[b] = (lw + gate * (w_update - lw)).astype(out_ref.dtype)


def pack_wtlu_params(params_list, orig_dim, map_dim):
    """One-time (init-time) packing of B WTLU parameter sets.

    params_list[i] = (w1, b1, w2, b2, w3, b3) in PyTorch nn.Linear layout
    (w: (out_features, in_features), b: (out_features,)).
    """
    w1_all = jnp.concatenate([p[0] for p in params_list], axis=0)        # (B*orig, map)
    b1_all = jnp.concatenate(
        [jnp.broadcast_to(p[1][:, None], (orig_dim, map_dim))
         for p in params_list], axis=0)                                  # (B*orig, map)
    w23 = jnp.stack([jnp.concatenate([p[2].T, p[4].T], axis=1)
                     for p in params_list])                              # (B, map, 2*map)
    b23 = jnp.stack([jnp.broadcast_to(jnp.concatenate([p[3], p[5]])[None, :],
                                      (orig_dim, 2 * map_dim))
                     for p in params_list])                              # (B, orig, 2*map)
    return w1_all, b1_all, w23, b23


def wtlu_batched(last_w, z_cov, packed):
    """Batched WTLU forward: out[i] = WTLU_i(last_w[i], z_cov).

    last_w : (B, orig_dim, map_dim)  weights being gated/updated (aliased to out)
    z_cov  : (map_dim, map_dim)      shared covariance (as in GGCN.weight_transition)
    packed : output of pack_wtlu_params (done once at init)
    """
    B, orig_dim, map_dim = last_w.shape
    w1_all, b1_all, w23, b23 = packed

    full3 = lambda i: (0, 0, 0)
    full2 = lambda i: (0, 0)
    return pl.pallas_call(
        _wtlu_kernel,
        out_shape=jax.ShapeDtypeStruct((B, orig_dim, map_dim), last_w.dtype),
        grid=(1,),                                          # collapsed grid
        in_specs=[
            pl.BlockSpec((B, orig_dim, map_dim), full3),           # last_w
            pl.BlockSpec((map_dim, map_dim), full2),               # shared z_cov
            pl.BlockSpec((B * orig_dim, map_dim), full2),          # stacked w1
            pl.BlockSpec((B * orig_dim, map_dim), full2),          # pre-broadcast b1
            pl.BlockSpec((B, map_dim, 2 * map_dim), full3),        # [w2.T | w3.T]
            pl.BlockSpec((B, orig_dim, 2 * map_dim), full3),       # pre-broadcast [b2 | b3]
        ],
        out_specs=pl.BlockSpec((B, orig_dim, map_dim), full3),
        input_output_aliases={0: 0},   # gated in-place weight update
        compiler_params=pltpu.CompilerParams(
            dimension_semantics=("arbitrary",)),            # keep on one TC
    )(last_w, z_cov, w1_all, b1_all, w23, b23)


if __name__ == "__main__":
    # GGCN shapes: each recursion step updates mean_weight and log_std_weight
    # (both (hidden_dim, out_features)) through two WTLU instances sharing one
    # z_cov of shape (out_features, out_features)  ->  B = 2.
    hidden_dim, out_features = 32, 16
    orig_dim, map_dim = hidden_dim, out_features
    B = 2

    key = jax.random.PRNGKey(0)
    ks = jax.random.split(key, 2 + 6 * B)

    def init_linear(kw, kb, out_f, in_f):
        bound = 1.0 / (in_f ** 0.5)     # deterministic stand-in for torch Linear init
        w = jax.random.uniform(kw, (out_f, in_f), jnp.float32, -bound, bound)
        b = jax.random.uniform(kb, (out_f,), jnp.float32, -bound, bound)
        return w, b

    params_list = []
    for i in range(B):
        o = 2 + 6 * i
        w1, b1 = init_linear(ks[o + 0], ks[o + 1], orig_dim, map_dim)   # linear_1
        w2, b2 = init_linear(ks[o + 2], ks[o + 3], map_dim, map_dim)    # linear_2
        w3, b3 = init_linear(ks[o + 4], ks[o + 5], map_dim, map_dim)    # linear_3
        params_list.append((w1, b1, w2, b2, w3, b3))
    packed = pack_wtlu_params(params_list, orig_dim, map_dim)  # one-time packing

    last_w = jax.random.normal(ks[0], (B, orig_dim, map_dim), jnp.float32)
    z_diff = jax.random.normal(ks[1], (8, map_dim), jnp.float32)
    z_cov = z_diff.T @ z_diff                # shared by mean & log_std transitions

    # Pure-JAX reference (mirrors the PyTorch forward exactly).  Computed BEFORE
    # the kernel call because last_w is aliased/donated to the kernel output.
    def ref_one(lw, zc, p):
        w1, b1, w2, b2, w3, b3 = p
        n = zc.size
        d = zc - zc.mean()
        zn = d / jnp.sqrt(jnp.sum(d * d) / (n - 1))            # torch.std (unbiased)
        hidden = jnp.maximum((zn @ w1.T + b1).T, 0.0)
        wu = jnp.clip(hidden @ w2.T + b2, -0.1, 0.1)
        gate = jax.nn.sigmoid(hidden @ w3.T + b3)
        return (1.0 - gate) * lw + wu * gate

    ref = jnp.stack([ref_one(last_w[i], z_cov, params_list[i]) for i in range(B)])
    ref = jax.block_until_ready(ref)

    out = jax.block_until_ready(wtlu_batched(last_w, z_cov, packed))

    assert out.shape == (B, orig_dim, map_dim)
    assert jnp.allclose(out, ref, atol=1e-4, rtol=1e-4), "mismatch vs reference"
    print("KERNEL_OK")
</pallas_src>

<mosaic_0001>
module attributes {stable_mosaic.version = 11 : i64} {
  func.func @_wtlu_kernel(%arg0: i32, %arg1: memref<2x32x16xf32, #tpu.memory_space<vmem>>, %arg2: memref<16x16xf32, #tpu.memory_space<vmem>>, %arg3: memref<64x16xf32, #tpu.memory_space<vmem>>, %arg4: memref<64x16xf32, #tpu.memory_space<vmem>>, %arg5: memref<2x16x32xf32, #tpu.memory_space<vmem>>, %arg6: memref<2x32x32xf32, #tpu.memory_space<vmem>>, %arg7: memref<2x32x16xf32, #tpu.memory_space<vmem>>) attributes {dimension_semantics = [#tpu.dimension_semantics<arbitrary>], iteration_bounds = array<i64: 1>, scalar_prefetch = 0 : i64, scratch_operands = 0 : i64, tpu.core_type = #tpu.core_type<tc>, window_params = [{pipeline_mode = #tpu.pipeline_mode<synchronous>, transform_indices = @transform_0, window_bounds = array<i64: 2, 32, 16>}, {pipeline_mode = #tpu.pipeline_mode<synchronous>, transform_indices = @transform_1, window_bounds = array<i64: 16, 16>}, {pipeline_mode = #tpu.pipeline_mode<synchronous>, transform_indices = @transform_2, window_bounds = array<i64: 64, 16>}, {pipeline_mode = #tpu.pipeline_mode<synchronous>, transform_indices = @transform_3, window_bounds = array<i64: 64, 16>}, {pipeline_mode = #tpu.pipeline_mode<synchronous>, transform_indices = @transform_4, window_bounds = array<i64: 2, 16, 32>}, {pipeline_mode = #tpu.pipeline_mode<synchronous>, transform_indices = @transform_5, window_bounds = array<i64: 2, 32, 32>}, {pipeline_mode = #tpu.pipeline_mode<synchronous>, transform_indices = @transform_6, window_bounds = array<i64: 2, 32, 16>}]} {
    %c0 = arith.constant 0 : index
    %c0_0 = arith.constant 0 : index
    %0 = vector.load %arg2[%c0, %c0_0] : memref<16x16xf32, #tpu.memory_space<vmem>>, vector<16x16xf32>
    %1 = vector.shape_cast %0 : vector<16x16xf32> to vector<1x16x16xf32>
    %cst = arith.constant dense<0.000000e+00> : vector<1xf32>
    %2 = vector.multi_reduction <add>, %1, %cst [1, 2] : vector<1x16x16xf32> to vector<1xf32>
    %3 = vector.shape_cast %2 : vector<1xf32> to vector<1x1x1xf32>
    %4 = vector.extract %3[0, 0, 0] : f32 from vector<1x1x1xf32>
    %cst_1 = arith.constant 3.906250e-03 : f32
    %5 = arith.mulf %4, %cst_1 : f32
    %6 = vector.broadcast %5 : f32 to vector<16x16xf32>
    %7 = arith.subf %0, %6 : vector<16x16xf32>
    %8 = arith.mulf %7, %7 : vector<16x16xf32>
    %9 = vector.shape_cast %8 : vector<16x16xf32> to vector<1x16x16xf32>
    %cst_2 = arith.constant dense<0.000000e+00> : vector<1xf32>
    %10 = vector.multi_reduction <add>, %9, %cst_2 [1, 2] : vector<1x16x16xf32> to vector<1xf32>
    %11 = vector.shape_cast %10 : vector<1xf32> to vector<1x1x1xf32>
    %12 = vector.extract %11[0, 0, 0] : f32 from vector<1x1x1xf32>
    %cst_3 = arith.constant 0.00392156886 : f32
    %13 = arith.mulf %12, %cst_3 : f32
    %14 = math.rsqrt %13 : f32
    %15 = vector.broadcast %14 : f32 to vector<16x16xf32>
    %16 = arith.mulf %7, %15 : vector<16x16xf32>
    %c0_4 = arith.constant 0 : index
    %c0_5 = arith.constant 0 : index
    %17 = vector.load %arg3[%c0_4, %c0_5] : memref<64x16xf32, #tpu.memory_space<vmem>>, vector<64x16xf32>
    %cst_6 = arith.constant dense<0.000000e+00> : vector<64x16xf32>
    %18 = tpu.matmul %17, %16, %cst_6 {dimension_numbers = #tpu.dot_dimension_numbers<[1], [1], [0], [0], [0, 0, 1, 0], [], []>} : vector<64x16xf32>, vector<16x16xf32>, vector<64x16xf32> -> vector<64x16xf32>
    %c0_7 = arith.constant 0 : index
    %c0_8 = arith.constant 0 : index
    %19 = vector.load %arg4[%c0_7, %c0_8] : memref<64x16xf32, #tpu.memory_space<vmem>>, vector<64x16xf32>
    %20 = arith.addf %18, %19 : vector<64x16xf32>
    %cst_9 = arith.constant 0.000000e+00 : f32
    %21 = vector.broadcast %cst_9 : f32 to vector<64x16xf32>
    %22 = arith.maximumf %20, %21 : vector<64x16xf32>
    %23 = vector.extract_strided_slice %22 {offsets = [0, 0], sizes = [32, 16], strides = [1, 1]} : vector<64x16xf32> to vector<32x16xf32>
    %c0_10 = arith.constant 0 : index
    %c0_11 = arith.constant 0 : index
    %c0_12 = arith.constant 0 : index
    %24 = vector.load %arg5[%c0_10, %c0_11, %c0_12] : memref<2x16x32xf32, #tpu.memory_space<vmem>>, vector<1x16x32xf32>
    %25 = vector.shape_cast %24 : vector<1x16x32xf32> to vector<16x32xf32>
    %cst_13 = arith.constant dense<0.000000e+00> : vector<32x32xf32>
    %26 = tpu.matmul %23, %25, %cst_13 {dimension_numbers = #tpu.dot_dimension_numbers<[1], [0], [0], [1], [0, 0, 1, 1], [], []>} : vector<32x16xf32>, vector<16x32xf32>, vector<32x32xf32> -> vector<32x32xf32>
    %c0_14 = arith.constant 0 : index
    %c0_15 = arith.constant 0 : index
    %c0_16 = arith.constant 0 : index
    %27 = vector.load %arg6[%c0_14, %c0_15, %c0_16] : memref<2x32x32xf32, #tpu.memory_space<vmem>>, vector<1x32x32xf32>
    %28 = vector.shape_cast %27 : vector<1x32x32xf32> to vector<32x32xf32>
    %29 = arith.addf %26, %28 : vector<32x32xf32>
    %30 = vector.extract_strided_slice %29 {offsets = [0, 0], sizes = [32, 16], strides = [1, 1]} : vector<32x32xf32> to vector<32x16xf32>
    %cst_17 = arith.constant -1.000000e-01 : f32
    %cst_18 = arith.constant 1.000000e-01 : f32
    %31 = vector.broadcast %cst_17 : f32 to vector<32x16xf32>
    %32 = arith.maximumf %31, %30 : vector<32x16xf32>
    %33 = vector.broadcast %cst_18 : f32 to vector<32x16xf32>
    %34 = arith.minimumf %33, %32 : vector<32x16xf32>
    %35 = vector.extract_strided_slice %29 {offsets = [0, 16], sizes = [32, 16], strides = [1, 1]} : vector<32x32xf32> to vector<32x16xf32>
    %cst_19 = arith.constant 0.000000e+00 : f32
    %36 = vector.broadcast %cst_19 : f32 to vector<32x16xf32>
    %37 = arith.subf %36, %35 : vector<32x16xf32>
    %38 = math.exp %37 : vector<32x16xf32>
    %cst_20 = arith.constant 1.000000e+00 : f32
    %39 = vector.broadcast %cst_20 : f32 to vector<32x16xf32>
    %40 = arith.addf %39, %38 : vector<32x16xf32>
    %cst_21 = arith.constant 1.000000e+00 : f32
    %41 = vector.broadcast %cst_21 : f32 to vector<32x16xf32>
    %42 = arith.divf %41, %40 : vector<32x16xf32>
    %c0_22 = arith.constant 0 : index
    %c0_23 = arith.constant 0 : index
    %c0_24 = arith.constant 0 : index
    %43 = vector.load %arg1[%c0_22, %c0_23, %c0_24] : memref<2x32x16xf32, #tpu.memory_space<vmem>>, vector<1x32x16xf32>
    %44 = vector.shape_cast %43 : vector<1x32x16xf32> to vector<32x16xf32>
    %45 = arith.subf %34, %44 : vector<32x16xf32>
    %46 = arith.mulf %42, %45 : vector<32x16xf32>
    %47 = arith.addf %44, %46 : vector<32x16xf32>
    %c0_25 = arith.constant 0 : index
    %c0_26 = arith.constant 0 : index
    %c0_27 = arith.constant 0 : index
    %48 = vector.load %arg7[%c0_25, %c0_26, %c0_27] : memref<2x32x16xf32, #tpu.memory_space<vmem>>, vector<1x32x16xf32>
    %49 = vector.shape_cast %48 : vector<1x32x16xf32> to vector<32x16xf32>
    %50 = vector.shape_cast %47 : vector<32x16xf32> to vector<1x32x16xf32>
    tpu.vector_store %arg7[%c0_25, %c0_26, %c0_27], %50 {strides = array<i32>} : memref<2x32x16xf32, #tpu.memory_space<vmem>>, vector<1x32x16xf32>,
    %51 = vector.extract_strided_slice %22 {offsets = [32, 0], sizes = [32, 16], strides = [1, 1]} : vector<64x16xf32> to vector<32x16xf32>
    %c1 = arith.constant 1 : index
    %c0_28 = arith.constant 0 : index
    %c0_29 = arith.constant 0 : index
    %52 = vector.load %arg5[%c1, %c0_28, %c0_29] : memref<2x16x32xf32, #tpu.memory_space<vmem>>, vector<1x16x32xf32>
    %53 = vector.shape_cast %52 : vector<1x16x32xf32> to vector<16x32xf32>
    %cst_30 = arith.constant dense<0.000000e+00> : vector<32x32xf32>
    %54 = tpu.matmul %51, %53, %cst_30 {dimension_numbers = #tpu.dot_dimension_numbers<[1], [0], [0], [1], [0, 0, 1, 1], [], []>} : vector<32x16xf32>, vector<16x32xf32>, vector<32x32xf32> -> vector<32x32xf32>
    %c1_31 = arith.constant 1 : index
    %c0_32 = arith.constant 0 : index
    %c0_33 = arith.constant 0 : index
    %55 = vector.load %arg6[%c1_31, %c0_32, %c0_33] : memref<2x32x32xf32, #tpu.memory_space<vmem>>, vector<1x32x32xf32>
    %56 = vector.shape_cast %55 : vector<1x32x32xf32> to vector<32x32xf32>
    %57 = arith.addf %54, %56 : vector<32x32xf32>
    %58 = vector.extract_strided_slice %57 {offsets = [0, 0], sizes = [32, 16], strides = [1, 1]} : vector<32x32xf32> to vector<32x16xf32>
    %cst_34 = arith.constant -1.000000e-01 : f32
    %cst_35 = arith.constant 1.000000e-01 : f32
    %59 = vector.broadcast %cst_34 : f32 to vector<32x16xf32>
    %60 = arith.maximumf %59, %58 : vector<32x16xf32>
    %61 = vector.broadcast %cst_35 : f32 to vector<32x16xf32>
    %62 = arith.minimumf %61, %60 : vector<32x16xf32>
    %63 = vector.extract_strided_slice %57 {offsets = [0, 16], sizes = [32, 16], strides = [1, 1]} : vector<32x32xf32> to vector<32x16xf32>
    %cst_36 = arith.constant 0.000000e+00 : f32
    %64 = vector.broadcast %cst_36 : f32 to vector<32x16xf32>
    %65 = arith.subf %64, %63 : vector<32x16xf32>
    %66 = math.exp %65 : vector<32x16xf32>
    %cst_37 = arith.constant 1.000000e+00 : f32
    %67 = vector.broadcast %cst_37 : f32 to vector<32x16xf32>
    %68 = arith.addf %67, %66 : vector<32x16xf32>
    %cst_38 = arith.constant 1.000000e+00 : f32
    %69 = vector.broadcast %cst_38 : f32 to vector<32x16xf32>
    %70 = arith.divf %69, %68 : vector<32x16xf32>
    %c1_39 = arith.constant 1 : index
    %c0_40 = arith.constant 0 : index
    %c0_41 = arith.constant 0 : index
    %71 = vector.load %arg1[%c1_39, %c0_40, %c0_41] : memref<2x32x16xf32, #tpu.memory_space<vmem>>, vector<1x32x16xf32>
    %72 = vector.shape_cast %71 : vector<1x32x16xf32> to vector<32x16xf32>
    %73 = arith.subf %62, %72 : vector<32x16xf32>
    %74 = arith.mulf %70, %73 : vector<32x16xf32>
    %75 = arith.addf %72, %74 : vector<32x16xf32>
    %c1_42 = arith.constant 1 : index
    %c0_43 = arith.constant 0 : index
    %c0_44 = arith.constant 0 : index
    %76 = vector.load %arg7[%c1_42, %c0_43, %c0_44] : memref<2x32x16xf32, #tpu.memory_space<vmem>>, vector<1x32x16xf32>
    %77 = vector.shape_cast %76 : vector<1x32x16xf32> to vector<32x16xf32>
    %78 = vector.shape_cast %75 : vector<32x16xf32> to vector<1x32x16xf32>
    tpu.vector_store %arg7[%c1_42, %c0_43, %c0_44], %78 {strides = array<i32>} : memref<2x32x16xf32, #tpu.memory_space<vmem>>, vector<1x32x16xf32>,
    return
  }
  func.func @transform_0(%arg0: i32) -> (i32, i32, i32) {
    %c0_i32 = arith.constant 0 : i32
    %c0_i32_0 = arith.constant 0 : i32
    %c0_i32_1 = arith.constant 0 : i32
    %c0_i32_2 = arith.constant 0 : i32
    return %c0_i32, %c0_i32_0, %c0_i32_1 : i32, i32, i32
  }
  func.func @transform_1(%arg0: i32) -> (i32, i32) {
    %c0_i32 = arith.constant 0 : i32
    %c0_i32_0 = arith.constant 0 : i32
    %c0_i32_1 = arith.constant 0 : i32
    return %c0_i32, %c0_i32_0 : i32, i32
  }
  func.func @transform_2(%arg0: i32) -> (i32, i32) {
    %c0_i32 = arith.constant 0 : i32
    %c0_i32_0 = arith.constant 0 : i32
    %c0_i32_1 = arith.constant 0 : i32
    return %c0_i32, %c0_i32_0 : i32, i32
  }
  func.func @transform_3(%arg0: i32) -> (i32, i32) {
    %c0_i32 = arith.constant 0 : i32
    %c0_i32_0 = arith.constant 0 : i32
    %c0_i32_1 = arith.constant 0 : i32
    return %c0_i32, %c0_i32_0 : i32, i32
  }
  func.func @transform_4(%arg0: i32) -> (i32, i32, i32) {
    %c0_i32 = arith.constant 0 : i32
    %c0_i32_0 = arith.constant 0 : i32
    %c0_i32_1 = arith.constant 0 : i32
    %c0_i32_2 = arith.constant 0 : i32
    return %c0_i32, %c0_i32_0, %c0_i32_1 : i32, i32, i32
  }
  func.func @transform_5(%arg0: i32) -> (i32, i32, i32) {
    %c0_i32 = arith.constant 0 : i32
    %c0_i32_0 = arith.constant 0 : i32
    %c0_i32_1 = arith.constant 0 : i32
    %c0_i32_2 = arith.constant 0 : i32
    return %c0_i32, %c0_i32_0, %c0_i32_1 : i32, i32, i32
  }
  func.func @transform_6(%arg0: i32) -> (i32, i32, i32) {
    %c0_i32 = arith.constant 0 : i32
    %c0_i32_0 = arith.constant 0 : i32
    %c0_i32_1 = arith.constant 0 : i32
    %c0_i32_2 = arith.constant 0 : i32
    return %c0_i32, %c0_i32_0, %c0_i32_1 : i32, i32, i32
  }
}

</mosaic_0001>

<llo_original>
// kernel: tpu_custom_call.1
$region0: #{tpu_custom_call.1}
  #allocation0 [shape = 'u32[]', space=smem, size = 0x4, offset = 0x4, fixed_abs, tag = 'smem constant byte address 0x4 - core index']
  #allocation1 [shape = 'u32[72,128]{1,0:T(1,128)}', space=vmem, size = 0x9000, scoped, tag = 'internal scratch']
  %s0 = inlined_call_operand.vmem [shape: f32[2,32,16], index: 0, kind: input, shape index: {}, may-alias: {0,6}]
  %s1 = inlined_call_operand.vmem [shape: f32[16,16], index: 1, kind: input, shape index: {}]
  %s2 = inlined_call_operand.vmem [shape: f32[64,16], index: 2, kind: input, shape index: {}]
  %s3 = inlined_call_operand.vmem [shape: f32[64,16], index: 3, kind: input, shape index: {}]
  %s4 = inlined_call_operand.vmem [shape: f32[2,16,32], index: 4, kind: input, shape index: {}]
  %s5 = inlined_call_operand.vmem [shape: f32[2,32,32], index: 5, kind: input, shape index: {}]
  %s6 = inlined_call_operand.vmem [shape: f32[2,32,16], index: 6, kind: output, shape index: {}, may-alias: {0,6}]
  %s7 = sld [smem:[#allocation0]]
  $region34: #{tpu_custom_call.1} parent=0
    _
  %s9 = ssub.s32 1, %s7
  %s10 = scalar_select 0, %s9, %s7
  // Predicated region
  $region2: #{tpu_custom_call.1} parent=0 // pred_check
    _
  $region3: #{tpu_custom_call.1} parent=0 // pred_check_branch
    %12 = sbr.rel (0) target = $region5
  $region4: #{tpu_custom_call.1} parent=0 // pred_region
    _
  $region5: #{tpu_custom_call.1} parent=0 // pred_fallthru
    _
  // Predicated region
  $region6: #{tpu_custom_call.1} parent=0 // pred_check
    _
  $region7: #{tpu_custom_call.1} parent=0 // pred_check_branch
    %14 = sbr.rel (0) target = $region9
  $region8: #{tpu_custom_call.1} parent=0 // pred_region
    _
  $region9: #{tpu_custom_call.1} parent=0 // pred_fallthru
    _
  // Predicated region
  $region10: #{tpu_custom_call.1} parent=0 // pred_check
    _
  $region11: #{tpu_custom_call.1} parent=0 // pred_check_branch
    %16 = sbr.rel (0) target = $region13
  $region12: #{tpu_custom_call.1} parent=0 // pred_region
    _
  $region13: #{tpu_custom_call.1} parent=0 // pred_fallthru
    _
  // Predicated region
  $region14: #{tpu_custom_call.1} parent=0 // pred_check
    _
  $region15: #{tpu_custom_call.1} parent=0 // pred_check_branch
    %18 = sbr.rel (0) target = $region17
  $region16: #{tpu_custom_call.1} parent=0 // pred_region
    _
  $region17: #{tpu_custom_call.1} parent=0 // pred_fallthru
    _
  // Predicated region
  $region18: #{tpu_custom_call.1} parent=0 // pred_check
    _
  $region19: #{tpu_custom_call.1} parent=0 // pred_check_branch
    %20 = sbr.rel (0) target = $region21
  $region20: #{tpu_custom_call.1} parent=0 // pred_region
    _
  $region21: #{tpu_custom_call.1} parent=0 // pred_fallthru
    _
  // Predicated region
  $region22: #{tpu_custom_call.1} parent=0 // pred_check
    _
  $region23: #{tpu_custom_call.1} parent=0 // pred_check_branch
    %22 = sbr.rel (0) target = $region25
  $region24: #{tpu_custom_call.1} parent=0 // pred_region
    _
  $region25: #{tpu_custom_call.1} parent=0 // pred_fallthru
    _
  %v23 = vld [vmem:[%s1] sm:$0xff]
  %v24 = vld [vmem:[%s1 + $0x8] sm:$0xff]
  %vm25 = vcmask 130048
  %v26 = vsel %vm25, %v23, 0.0
  %v27 = vsel %vm25, %v24, 0.0
  %v28 = vadd.f32 %v26, %v27
  %29 = vadd.xlane.f32.xlu0 %v28
  %v30 = vpop.xlane.xlu0 %29
  %v31 = vrot.slane %v30, 4
  %v32 = vadd.f32 %v30, %v31
  %v33 = vrot.slane %v32, 2
  %v34 = vadd.f32 %v32, %v33
  %v35 = vrot.slane %v34, 1
  %v36 = vadd.f32 %v34, %v35
  %s37 = vtos %v36
  %s38 = smul.f32 %s37, 0.00390625
  %v39 = vstv %s38
  %v40 = vsub.f32 %v23, %v39
  %v41 = vsub.f32 %v24, %v39
  %v42 = vmul.f32 %v40, %v40
  %v43 = vmul.f32 %v41, %v41
  %v44 = vsel %vm25, %v42, 0.0
  %v45 = vsel %vm25, %v43, 0.0
  %v46 = vadd.f32 %v44, %v45
  %47 = vadd.xlane.f32.xlu0 %v46
  %v48 = vpop.xlane.xlu0 %47
  %v49 = vrot.slane %v48, 4
  %v50 = vadd.f32 %v48, %v49
  %v51 = vrot.slane %v50, 2
  %v52 = vadd.f32 %v50, %v51
  %v53 = vrot.slane %v52, 1
  %v54 = vadd.f32 %v52, %v53
  %s55 = vtos %v54
  %s56 = smul.f32 %s55, 0.003921569
  %v57 = vstv %s56
  %v58 = vrsqrt.pop %v57
  %v59 = vmul.f32 %v58, %v57
  %v60 = vmul.f32 %v59, %v58
  %v61 = vmul.f32 0.5, %v60
  %v62 = vsub.f32 1.5, %v61
  %v63 = vmul.f32 %v58, %v62
  %vm64 = vweird.f32 %v57
  %vm65 = vweird.f32 %v58
  %vm66 = vmor %vm64, %vm65
  %v67 = vsel %vm66, %v58, %v63
  %s68 = vtos %v67
  %v69 = vstv %s68
  %v70 = vmul.f32 %v40, %v69
  %v71 = vmul.f32 %v41, %v69
  %v72 = vld [vmem:[%s2] sm:$0xff]
  %v73 = vld [vmem:[%s2 + $0x8] sm:$0xff]
  %v74 = vld [vmem:[%s2 + $0x10] sm:$0xff]
  %v75 = vld [vmem:[%s2 + $0x18] sm:$0xff]
  %v76 = vld [vmem:[%s2 + $0x20] sm:$0xff]
  %v77 = vld [vmem:[%s2 + $0x28] sm:$0xff]
  %v78 = vld [vmem:[%s2 + $0x30] sm:$0xff]
  %v79 = vld [vmem:[%s2 + $0x38] sm:$0xff]
  %v80 = vld [vmem:[%s3] sm:$0xff]
  %v81 = vld [vmem:[%s3 + $0x8] sm:$0xff]
  %v82 = vld [vmem:[%s3 + $0x10] sm:$0xff]
  %v83 = vld [vmem:[%s3 + $0x18] sm:$0xff]
  %v84 = vld [vmem:[%s3 + $0x20] sm:$0xff]
  %v85 = vld [vmem:[%s3 + $0x28] sm:$0xff]
  %v86 = vld [vmem:[%s3 + $0x30] sm:$0xff]
  %v87 = vld [vmem:[%s3 + $0x38] sm:$0xff]
  %v89 = vsel %vm25, %v72, 0
  %v92 = vsel %vm25, %v73, 0
  %v95 = vsel %vm25, %v74, 0
  %v98 = vsel %vm25, %v75, 0
  %v101 = vsel %vm25, %v76, 0
  %v104 = vsel %vm25, %v77, 0
  %v107 = vsel %vm25, %v78, 0
  %v110 = vsel %vm25, %v79, 0
  %v113 = vsel %vm25, %v70, 0
  %v116 = vsel %vm25, %v71, 0
  %118 = vmatpush.xpose.msra.mxu0 0.0
  %119 = vmatpush.xpose.msra.mxu0 0.0
  %120 = vmatpush.xpose.msra.mxu0 0.0
  %121 = vmatpush.xpose.msra.mxu0 0.0
  %122 = vmatpush.xpose.msra.mxu0 0.0
  %123 = vmatpush.xpose.msra.mxu0 0.0
  %124 = vmatpush.xpose.msra.mxu0 0.0
  %125 = vmatpush.xpose.msra.mxu0 0.0
  %126 = vmatpush.xpose.msra.mxu0 0.0
  %127 = vmatpush.xpose.msra.mxu0 0.0
  %128 = vmatpush.xpose.msra.mxu0 0.0
  %129 = vmatpush.xpose.msra.mxu0 0.0
  %130 = vmatpush.xpose.msra.mxu0 0.0
  %131 = vmatpush.xpose.msra.mxu0 0.0
  %132 = vmatpush.xpose.msra.mxu0 %v116
  %133 = vmatpush.xpose.msra.mxu0 %v113
  %134 = vmatmul.f32.gmra.mxu0 %v89
  %v135 = vpop.f32.mrf.mxu0
  %v136 = vadd.f32 %v80, %v135
  %137 = vmatmul.f32.gmra.mxu0 %v92
  %v138 = vpop.f32.mrf.mxu0
  %v139 = vadd.f32 %v81, %v138
  %140 = vmatmul.f32.gmra.mxu0 %v95
  %v141 = vpop.f32.mrf.mxu0
  %v142 = vadd.f32 %v82, %v141
  %143 = vmatmul.f32.gmra.mxu0 %v98
  %v144 = vpop.f32.mrf.mxu0
  %v145 = vadd.f32 %v83, %v144
  %146 = vmatmul.f32.gmra.mxu0 %v101
  %v147 = vpop.f32.mrf.mxu0
  %v148 = vadd.f32 %v84, %v147
  %149 = vmatmul.f32.gmra.mxu0 %v104
  %v150 = vpop.f32.mrf.mxu0
  %v151 = vadd.f32 %v85, %v150
  %152 = vmatmul.f32.gmra.mxu0 %v107
  %v153 = vpop.f32.mrf.mxu0
  %v154 = vadd.f32 %v86, %v153
  %155 = vmatmul.f32.gmra.mxu0 %v110
  %v156 = vpop.f32.mrf.mxu0
  %v157 = vadd.f32 %v87, %v156
  %158 = vdwg.mxu0
  %v159 = vmax.f32 %v136, 0.0
  %v160 = vmax.f32 %v139, 0.0
  %v161 = vmax.f32 %v142, 0.0
  %v162 = vmax.f32 %v145, 0.0
  %v163 = vmax.f32 %v148, 0.0
  %v164 = vmax.f32 %v151, 0.0
  %v165 = vmax.f32 %v154, 0.0
  %v166 = vmax.f32 %v157, 0.0
  %v167 = vld [vmem:[%s4] sm:$0xff]
  %v168 = vld [vmem:[%s4 + $0x8] sm:$0xff]
  %v169 = vld [vmem:[%s5] sm:$0xff]
  %v170 = vld [vmem:[%s5 + $0x8] sm:$0xff]
  %v171 = vld [vmem:[%s5 + $0x10] sm:$0xff]
  %v172 = vld [vmem:[%s5 + $0x18] sm:$0xff]
  %v174 = vsel %vm25, %v159, 0
  %v177 = vsel %vm25, %v160, 0
  %v180 = vsel %vm25, %v161, 0
  %v183 = vsel %vm25, %v162, 0
  %185 = vmatpush.msra.mxu0 0.0
  %186 = vmatpush.msra.mxu0 0.0
  %187 = vmatpush.msra.mxu0 0.0
  %188 = vmatpush.msra.mxu0 0.0
  %189 = vmatpush.msra.mxu0 0.0
  %190 = vmatpush.msra.mxu0 0.0
  %191 = vmatpush.msra.mxu0 0.0
  %192 = vmatpush.msra.mxu0 0.0
  %193 = vmatpush.msra.mxu0 0.0
  %194 = vmatpush.msra.mxu0 0.0
  %195 = vmatpush.msra.mxu0 0.0
  %196 = vmatpush.msra.mxu0 0.0
  %197 = vmatpush.msra.mxu0 0.0
  %198 = vmatpush.msra.mxu0 0.0
  %199 = vmatpush.msra.mxu0 %v168
  %200 = vmatpush.msra.mxu0 %v167
  %201 = vmatmul.f32.gmra.mxu0 %v174
  %v202 = vpop.f32.mrf.mxu0
  %v203 = vadd.f32 %v169, %v202
  %204 = vmatmul.f32.gmra.mxu0 %v177
  %v205 = vpop.f32.mrf.mxu0
  %v206 = vadd.f32 %v170, %v205
  %207 = vmatmul.f32.gmra.mxu0 %v180
  %v208 = vpop.f32.mrf.mxu0
  %v209 = vadd.f32 %v171, %v208
  %210 = vmatmul.f32.gmra.mxu0 %v183
  %v211 = vpop.f32.mrf.mxu0
  %v212 = vadd.f32 %v172, %v211
  %213 = vdwg.mxu0
  %v214 = vmax.f32 %v203, -0.1
  %v215 = vmax.f32 %v206, -0.1
  %v216 = vmax.f32 %v209, -0.1
  %v217 = vmax.f32 %v212, -0.1
  %v218 = vmin.f32 %v214, 0.1
  %v219 = vmin.f32 %v215, 0.1
  %v220 = vmin.f32 %v216, 0.1
  %v221 = vmin.f32 %v217, 0.1
  %v222 = vsub.f32 0.0, %v203
  %v223 = vsub.f32 0.0, %v206
  %v224 = vsub.f32 0.0, %v209
  %v225 = vsub.f32 0.0, %v212
  %v226 = vmul.f32 %v222, 1.442695
  %v227 = vpow.pop %v226
  %v228 = vmul.f32 %v223, 1.442695
  %v229 = vpow.pop %v228
  %v230 = vmul.f32 %v224, 1.442695
  %v231 = vpow.pop %v230
  %v232 = vmul.f32 %v225, 1.442695
  %v233 = vpow.pop %v232
  %v234 = vadd.f32 %v227, 1.0
  %v235 = vadd.f32 %v229, 1.0
  %v236 = vadd.f32 %v231, 1.0
  %v237 = vadd.f32 %v233, 1.0
  %v238 = vrcp.pop %v234
  %v239 = vmul.f32 %v234, %v238
  %v240 = vsub.f32 1.0, %v239
  %v241 = vmul.f32 %v238, %v240
  %v242 = vadd.f32 %v238, %v241
  %vm243 = vweird.f32 %v234
  %vm244 = vweird.f32 %v238
  %vm245 = vmor %vm243, %vm244
  %v246 = vsel %vm245, %v238, %v242
  %v247 = vand.u32 2147483647, %v234
  %vm248 = vcmp.eq.f32.partialorder %v247, 8.507059e+37
  %v249 = vand.u32 %v234, 2147483648
  %v250 = vor.u32 1.1754944e-38, %v249
  %v251 = vsel %vm248, %v250, %v246
  %v252 = vmul.f32 1.0, %v251
  %v253 = vrcp.pop %v235
  %v254 = vmul.f32 %v235, %v253
  %v255 = vsub.f32 1.0, %v254
  %v256 = vmul.f32 %v253, %v255
  %v257 = vadd.f32 %v253, %v256
  %vm258 = vweird.f32 %v235
  %vm259 = vweird.f32 %v253
  %vm260 = vmor %vm258, %vm259
  %v261 = vsel %vm260, %v253, %v257
  %v262 = vand.u32 2147483647, %v235
  %vm263 = vcmp.eq.f32.partialorder %v262, 8.507059e+37
  %v264 = vand.u32 %v235, 2147483648
  %v265 = vor.u32 1.1754944e-38, %v264
  %v266 = vsel %vm263, %v265, %v261
  %v267 = vmul.f32 1.0, %v266
  %v268 = vrcp.pop %v236
  %v269 = vmul.f32 %v236, %v268
  %v270 = vsub.f32 1.0, %v269
  %v271 = vmul.f32 %v268, %v270
  %v272 = vadd.f32 %v268, %v271
  %vm273 = vweird.f32 %v236
  %vm274 = vweird.f32 %v268
  %vm275 = vmor %vm273, %vm274
  %v276 = vsel %vm275, %v268, %v272
  %v277 = vand.u32 2147483647, %v236
  %vm278 = vcmp.eq.f32.partialorder %v277, 8.507059e+37
  %v279 = vand.u32 %v236, 2147483648
  %v280 = vor.u32 1.1754944e-38, %v279
  %v281 = vsel %vm278, %v280, %v276
  %v282 = vmul.f32 1.0, %v281
  %v283 = vrcp.pop %v237
  %v284 = vmul.f32 %v237, %v283
  %v285 = vsub.f32 1.0, %v284
  %v286 = vmul.f32 %v283, %v285
  %v287 = vadd.f32 %v283, %v286
  %vm288 = vweird.f32 %v237
  %vm289 = vweird.f32 %v283
  %vm290 = vmor %vm288, %vm289
  %v291 = vsel %vm290, %v283, %v287
  %v292 = vand.u32 2147483647, %v237
  %vm293 = vcmp.eq.f32.partialorder %v292, 8.507059e+37
  %v294 = vand.u32 %v237, 2147483648
  %v295 = vor.u32 1.1754944e-38, %v294
  %v296 = vsel %vm293, %v295, %v291
  %v297 = vmul.f32 1.0, %v296
  %v298 = vld [vmem:[%s0] sm:$0xff]
  %v299 = vld [vmem:[%s0 + $0x8] sm:$0xff]
  %v300 = vld [vmem:[%s0 + $0x10] sm:$0xff]
  %v301 = vld [vmem:[%s0 + $0x18] sm:$0xff]
  %v302 = vsub.f32 %v218, %v298
  %v303 = vsub.f32 %v219, %v299
  %v304 = vsub.f32 %v220, %v300
  %v305 = vsub.f32 %v221, %v301
  %310 = vrot.lane.b32.xlu0 %v302, 16
  %v311 = vpop.permute.xlu0 %310
  %312 = vrot.lane.b32.xlu0 %v303, 16
  %v313 = vpop.permute.xlu0 %312
  %314 = vrot.lane.b32.xlu0 %v304, 16
  %v315 = vpop.permute.xlu0 %314
  %316 = vrot.lane.b32.xlu0 %v305, 16
  %v317 = vpop.permute.xlu0 %316
  %v322 = vmul.f32 %v252, %v311
  %v323 = vmul.f32 %v267, %v313
  %v324 = vmul.f32 %v282, %v315
  %v325 = vmul.f32 %v297, %v317
  %330 = vrot.lane.b32.xlu0 %v322, 112
  %v331 = vpop.permute.xlu0 %330
  %332 = vrot.lane.b32.xlu0 %v323, 112
  %v333 = vpop.permute.xlu0 %332
  %334 = vrot.lane.b32.xlu0 %v324, 112
  %v335 = vpop.permute.xlu0 %334
  %336 = vrot.lane.b32.xlu0 %v325, 112
  %v337 = vpop.permute.xlu0 %336
  %v342 = vadd.f32 %v298, %v331
  %v343 = vadd.f32 %v299, %v333
  %v344 = vadd.f32 %v300, %v335
  %v345 = vadd.f32 %v301, %v337
  %346 = vst.msk [vmem:[%s6] sm:$0xff] %vm25, %v342
  %347 = vst.msk [vmem:[%s6 + $0x8] sm:$0xff] %vm25, %v343
  %348 = vst.msk [vmem:[%s6 + $0x10] sm:$0xff] %vm25, %v344
  %349 = vst.msk [vmem:[%s6 + $0x18] sm:$0xff] %vm25, %v345
  %s350 = scalar_lea.vmem %s4, 16
  %v351 = vld [vmem:[%s350] sm:$0xff]
  %v352 = vld [vmem:[%s350 + $0x8] sm:$0xff]
  %s353 = scalar_lea.vmem %s5, 32
  %v354 = vld [vmem:[%s353] sm:$0xff]
  %v355 = vld [vmem:[%s353 + $0x8] sm:$0xff]
  %v356 = vld [vmem:[%s353 + $0x10] sm:$0xff]
  %v357 = vld [vmem:[%s353 + $0x18] sm:$0xff]
  %v359 = vsel %vm25, %v163, 0
  %v362 = vsel %vm25, %v164, 0
  %v365 = vsel %vm25, %v165, 0
  %v368 = vsel %vm25, %v166, 0
  %370 = vmatpush.msra.mxu0 0.0
  %371 = vmatpush.msra.mxu0 0.0
  %372 = vmatpush.msra.mxu0 0.0
  %373 = vmatpush.msra.mxu0 0.0
  %374 = vmatpush.msra.mxu0 0.0
  %375 = vmatpush.msra.mxu0 0.0
  %376 = vmatpush.msra.mxu0 0.0
  %377 = vmatpush.msra.mxu0 0.0
  %378 = vmatpush.msra.mxu0 0.0
  %379 = vmatpush.msra.mxu0 0.0
  %380 = vmatpush.msra.mxu0 0.0
  %381 = vmatpush.msra.mxu0 0.0
  %382 = vmatpush.msra.mxu0 0.0
  %383 = vmatpush.msra.mxu0 0.0
  %384 = vmatpush.msra.mxu0 %v352
  %385 = vmatpush.msra.mxu0 %v351
  %386 = vmatmul.f32.gmra.mxu0 %v359
  %v387 = vpop.f32.mrf.mxu0
  %v388 = vadd.f32 %v354, %v387
  %389 = vmatmul.f32.gmra.mxu0 %v362
  %v390 = vpop.f32.mrf.mxu0
  %v391 = vadd.f32 %v355, %v390
  %392 = vmatmul.f32.gmra.mxu0 %v365
  %v393 = vpop.f32.mrf.mxu0
  %v394 = vadd.f32 %v356, %v393
  %395 = vmatmul.f32.gmra.mxu0 %v368
  %v396 = vpop.f32.mrf.mxu0
  %v397 = vadd.f32 %v357, %v396
  %398 = vdwg.mxu0
  %v399 = vmax.f32 %v388, -0.1
  %v400 = vmax.f32 %v391, -0.1
  %v401 = vmax.f32 %v394, -0.1
  %v402 = vmax.f32 %v397, -0.1
  %v403 = vmin.f32 %v399, 0.1
  %v404 = vmin.f32 %v400, 0.1
  %v405 = vmin.f32 %v401, 0.1
  %v406 = vmin.f32 %v402, 0.1
  %v407 = vsub.f32 0.0, %v388
  %v408 = vsub.f32 0.0, %v391
  %v409 = vsub.f32 0.0, %v394
  %v410 = vsub.f32 0.0, %v397
  %v411 = vmul.f32 %v407, 1.442695
  %v412 = vpow.pop %v411
  %v413 = vmul.f32 %v408, 1.442695
  %v414 = vpow.pop %v413
  %v415 = vmul.f32 %v409, 1.442695
  %v416 = vpow.pop %v415
  %v417 = vmul.f32 %v410, 1.442695
  %v418 = vpow.pop %v417
  %v419 = vadd.f32 %v412, 1.0
  %v420 = vadd.f32 %v414, 1.0
  %v421 = vadd.f32 %v416, 1.0
  %v422 = vadd.f32 %v418, 1.0
  %v423 = vrcp.pop %v419
  %v424 = vmul.f32 %v419, %v423
  %v425 = vsub.f32 1.0, %v424
  %v426 = vmul.f32 %v423, %v425
  %v427 = vadd.f32 %v423, %v426
  %vm428 = vweird.f32 %v419
  %vm429 = vweird.f32 %v423
  %vm430 = vmor %vm428, %vm429
  %v431 = vsel %vm430, %v423, %v427
  %v432 = vand.u32 2147483647, %v419
  %vm433 = vcmp.eq.f32.partialorder %v432, 8.507059e+37
  %v434 = vand.u32 %v419, 2147483648
  %v435 = vor.u32 1.1754944e-38, %v434
  %v436 = vsel %vm433, %v435, %v431
  %v437 = vmul.f32 1.0, %v436
  %v438 = vrcp.pop %v420
  %v439 = vmul.f32 %v420, %v438
  %v440 = vsub.f32 1.0, %v439
  %v441 = vmul.f32 %v438, %v440
  %v442 = vadd.f32 %v438, %v441
  %vm443 = vweird.f32 %v420
  %vm444 = vweird.f32 %v438
  %vm445 = vmor %vm443, %vm444
  %v446 = vsel %vm445, %v438, %v442
  %v447 = vand.u32 2147483647, %v420
  %vm448 = vcmp.eq.f32.partialorder %v447, 8.507059e+37
  %v449 = vand.u32 %v420, 2147483648
  %v450 = vor.u32 1.1754944e-38, %v449
  %v451 = vsel %vm448, %v450, %v446
  %v452 = vmul.f32 1.0, %v451
  %v453 = vrcp.pop %v421
  %v454 = vmul.f32 %v421, %v453
  %v455 = vsub.f32 1.0, %v454
  %v456 = vmul.f32 %v453, %v455
  %v457 = vadd.f32 %v453, %v456
  %vm458 = vweird.f32 %v421
  %vm459 = vweird.f32 %v453
  %vm460 = vmor %vm458, %vm459
  %v461 = vsel %vm460, %v453, %v457
  %v462 = vand.u32 2147483647, %v421
  %vm463 = vcmp.eq.f32.partialorder %v462, 8.507059e+37
  %v464 = vand.u32 %v421, 2147483648
  %v465 = vor.u32 1.1754944e-38, %v464
  %v466 = vsel %vm463, %v465, %v461
  %v467 = vmul.f32 1.0, %v466
  %v468 = vrcp.pop %v422
  %v469 = vmul.f32 %v422, %v468
  %v470 = vsub.f32 1.0, %v469
  %v471 = vmul.f32 %v468, %v470
  %v472 = vadd.f32 %v468, %v471
  %vm473 = vweird.f32 %v422
  %vm474 = vweird.f32 %v468
  %vm475 = vmor %vm473, %vm474
  %v476 = vsel %vm475, %v468, %v472
  %v477 = vand.u32 2147483647, %v422
  %vm478 = vcmp.eq.f32.partialorder %v477, 8.507059e+37
  %v479 = vand.u32 %v422, 2147483648
  %v480 = vor.u32 1.1754944e-38, %v479
  %v481 = vsel %vm478, %v480, %v476
  %v482 = vmul.f32 1.0, %v481
  %s483 = scalar_lea.vmem %s0, 32
  %v484 = vld [vmem:[%s483] sm:$0xff]
  %v485 = vld [vmem:[%s483 + $0x8] sm:$0xff]
  %v486 = vld [vmem:[%s483 + $0x10] sm:$0xff]
  %v487 = vld [vmem:[%s483 + $0x18] sm:$0xff]
  %v488 = vsub.f32 %v403, %v484
  %v489 = vsub.f32 %v404, %v485
  %v490 = vsub.f32 %v405, %v486
  %v491 = vsub.f32 %v406, %v487
  %496 = vrot.lane.b32.xlu0 %v488, 16
  %v497 = vpop.permute.xlu0 %496
  %498 = vrot.lane.b32.xlu0 %v489, 16
  %v499 = vpop.permute.xlu0 %498
  %500 = vrot.lane.b32.xlu0 %v490, 16
  %v501 = vpop.permute.xlu0 %500
  %502 = vrot.lane.b32.xlu0 %v491, 16
  %v503 = vpop.permute.xlu0 %502
  %v508 = vmul.f32 %v437, %v497
  %v509 = vmul.f32 %v452, %v499
  %v510 = vmul.f32 %v467, %v501
  %v511 = vmul.f32 %v482, %v503
  %516 = vrot.lane.b32.xlu0 %v508, 112
  %v517 = vpop.permute.xlu0 %516
  %518 = vrot.lane.b32.xlu0 %v509, 112
  %v519 = vpop.permute.xlu0 %518
  %520 = vrot.lane.b32.xlu0 %v510, 112
  %v521 = vpop.permute.xlu0 %520
  %522 = vrot.lane.b32.xlu0 %v511, 112
  %v523 = vpop.permute.xlu0 %522
  %v528 = vadd.f32 %v484, %v517
  %v529 = vadd.f32 %v485, %v519
  %v530 = vadd.f32 %v486, %v521
  %v531 = vadd.f32 %v487, %v523
  %s532 = scalar_lea.vmem %s6, 32
  %533 = vst.msk [vmem:[%s532] sm:$0xff] %vm25, %v528
  %534 = vst.msk [vmem:[%s532 + $0x8] sm:$0xff] %vm25, %v529
  %535 = vst.msk [vmem:[%s532 + $0x10] sm:$0xff] %vm25, %v530
  %536 = vst.msk [vmem:[%s532 + $0x18] sm:$0xff] %vm25, %v531
  // Predicated region
  $region26: #{tpu_custom_call.1} parent=0 // pred_check
    _
  $region27: #{tpu_custom_call.1} parent=0 // pred_check_branch
    %538 = sbr.rel (0) target = $region29
  $region28: #{tpu_custom_call.1} parent=0 // pred_region
    _
  $region29: #{tpu_custom_call.1} parent=0 // pred_fallthru
    _
  // Predicated region
  $region30: #{tpu_custom_call.1} parent=0 // pred_check
    _
  $region31: #{tpu_custom_call.1} parent=0 // pred_check_branch
    %540 = sbr.rel (0) target = $region33
  $region32: #{tpu_custom_call.1} parent=0 // pred_region
    _
  $region33: #{tpu_custom_call.1} parent=0 // pred_fallthru
    _

</llo_original>
